<compile_context>
chip_gen: v6e
topology: v6e:2x2x1
jax: 0.10.0
libtpu: 0.0.40
codegen_flags: <defaults>
</compile_context>

<pallas_src>
import jax
import jax.numpy as jnp
from jax.experimental import pallas as pl
from jax.experimental.pallas import tpu as pltpu

NUM_PIECES = 5
HIDDEN = 128
PH = NUM_PIECES * HIDDEN            # 640 fused maxout width (5 lane-aligned 128-slabs)

_DATA_BUDGET = 24 * 1024 * 1024     # target bytes for live kernel VMEM buffers
_VMEM_LIMIT = 32 * 1024 * 1024      # explicit scoped-VMEM limit handed to Mosaic
_MAX_TB = 512                       # batch-tile cap (rows)


def _round_up(n, m):
    return ((n + m - 1) // m) * m


def _choose_tiles(B, F):
    """Pick (tb, tk, num_k) so all live VMEM buffers fit the data budget.

    Buffers: f32 (tb, 640) accumulator, bf16 (tb, tk) x tile (double-buffered),
    bf16 (tk, 640) w1 tile (single-buffered when num_k == 1, else double-buffered),
    plus small bias / w2 / output buffers.
    """
    # Batch tile: multiple of 8, capped, and >= 2 tiles whenever B > 8 so the v7x
    # megacore has something to split (harmless on single-TC v5e/v6e).
    tb = B if B <= 8 else min(_MAX_TB, _round_up((B + 1) // 2, 8))

    def fits(tk, w1_bufs):
        acc = tb * PH * 4                       # f32 accumulator scratch
        x_buf = 2 * tb * tk * 2                 # bf16 x tile, double-buffered
        w1_buf = w1_bufs * tk * PH * 2          # bf16 fused weight tile(s)
        small = 2 * tb * 4 + PH * 4 + 128 * 128 * 4 + (1 << 16)   # out dbuf, b1, w2, slack
        return acc + x_buf + w1_buf + small <= _DATA_BUDGET

    if fits(F, 1):
        return tb, F, 1                          # whole feature dim VMEM-resident
    # K-tiled: w1 becomes double-buffered; tk a multiple of 256 (2x256 MXU on v6e/v7x,
    # also a multiple of 128 for v5e).  Choose the fewest K tiles that fit (min padding).
    num_k = 2
    while True:
        tk = _round_up(pl.cdiv(F, num_k), 256)
        if fits(tk, 2) or tk <= 256:
            return tb, tk, pl.cdiv(F, tk)
        num_k += 1


def _disc_kernel(x_ref, w1_ref, b1_ref, w2t_ref, b2_ref, o_ref, acc_ref):
    # x_ref  : (TB, TK)   bf16  batch x feature tile
    # w1_ref : (TK, P*H)  bf16  fused maxout weight, piece-major columns (col = p*H + o)
    # b1_ref : (1, P*H)   f32   fused maxout bias (same column order)
    # w2t_ref: (H, 1)     f32   final projection weight (column vector)
    # b2_ref : (1, 1)     f32   final projection bias (SMEM scalar)
    # o_ref  : (1, 1, TB) f32   lane-dense sigmoid outputs for this batch tile
    # acc_ref: (TB, P*H)  f32   matmul accumulator scratch
    k = pl.program_id(1)

    @pl.when(k == 0)
    def _():
        acc_ref[...] = jnp.zeros_like(acc_ref)

    # bf16 x bf16 MXU matmul over this K slab, f32 accumulation.
    acc_ref[...] += jnp.dot(x_ref[...], w1_ref[...], preferred_element_type=jnp.float32)

    @pl.when(k == pl.num_programs(1) - 1)
    def _():
        z = acc_ref[...] + b1_ref[...]                          # (TB, 640) f32
        # Maxout: elementwise max over the 5 lane-aligned 128-wide piece slabs (VPU).
        h = z[:, 0:HIDDEN]
        for p in range(1, NUM_PIECES):
            h = jnp.maximum(h, z[:, p * HIDDEN:(p + 1) * HIDDEN])
        # Lane-dense epilogue: move batch rows into lanes (f32 XLU transpose), then the
        # 128 -> 1 projection is a sublane reduce and the sigmoid/store run on full-lane
        # vregs instead of (TB, 1) masked stores.  Keeps the MXU out of the epilogue.
        ht = h.T                                                # (H, TB)
        logits = jnp.sum(ht * w2t_ref[...], axis=0, keepdims=True) + b2_ref[0, 0]  # (1, TB)
        sig = jax.nn.sigmoid(logits).astype(o_ref.dtype)
        o_ref[...] = sig[None]                                  # (1, 1, TB)


@jax.jit
def original_discriminator(x, w1, b1, w2t, b2):
    """x: (B, F).  w1: (F, 640) fused piece-major maxout weight, b1: (1, 640) f32,
    w2t: (128, 1) f32, b2: (1, 1) f32.  Returns sigmoid logits of shape (B, 1) f32."""
    B, F = x.shape
    assert w1.shape == (F, PH), w1.shape

    tb, tk, num_k = _choose_tiles(B, F)
    num_b = pl.cdiv(B, tb)
    f_pad = tk * num_k

    # bf16 MXU operands (accumulation is f32 in-kernel); epilogue params stay f32.
    xb = x.astype(jnp.bfloat16)
    w1b = w1.astype(jnp.bfloat16)
    if f_pad != F:
        # Zero-pad the contraction dim to a whole number of K tiles (exact: adds zeros).
        xb = jnp.pad(xb, ((0, 0), (0, f_pad - F)))
        w1b = jnp.pad(w1b, ((0, f_pad - F), (0, 0)))

    # Constant-index operands get a single pipeline buffer (no wasted second copy);
    # w1's block index is only constant when there is no K axis.
    resident = dict(pipeline_mode=pl.Buffered(1))
    w1_kwargs = resident if num_k == 1 else {}

    cost = pl.CostEstimate(
        flops=2 * B * f_pad * PH + 3 * B * PH + 2 * B * HIDDEN,
        transcendentals=B,
        bytes_accessed=(B * f_pad * 2 + num_b * f_pad * PH * 2 + num_b * tb * 4
                        + PH * 4 + HIDDEN * 4 + 4),
    )

    out_tiles = pl.pallas_call(
        _disc_kernel,
        out_shape=jax.ShapeDtypeStruct((num_b, 1, tb), jnp.float32),
        grid=(num_b, num_k),
        in_specs=[
            pl.BlockSpec((tb, tk), lambda i, k: (i, k)),                 # x: batch/K tiled
            pl.BlockSpec((tk, PH), lambda i, k: (k, 0), **w1_kwargs),    # w1 fused weight
            pl.BlockSpec((1, PH), lambda i, k: (0, 0), **resident),      # b1 (resident)
            pl.BlockSpec((HIDDEN, 1), lambda i, k: (0, 0), **resident),  # w2t (resident)
            pl.BlockSpec(memory_space=pltpu.MemorySpace.SMEM),           # b2 scalar
        ],
        out_specs=pl.BlockSpec((1, 1, tb), lambda i, k: (i, 0, 0)),
        scratch_shapes=[pltpu.VMEM((tb, PH), jnp.float32)],
        compiler_params=pltpu.CompilerParams(
            dimension_semantics=("parallel", "arbitrary"),
            vmem_limit_bytes=_VMEM_LIMIT,
        ),
        cost_estimate=cost,
    )(xb, w1b, b1, w2t, b2)

    # (num_b, 1, tb) lane-dense tiles -> (B, 1); padded tail rows are dropped.
    return out_tiles.reshape(num_b * tb)[:B].reshape(B, 1)


def init_params(key, in_features):
    """PyTorch nn.Linear default init (uniform +-1/sqrt(fan_in)), re-laid-out into the
    fused, piece-major shapes the kernel consumes.  w1 is returned in bf16 (MXU operand);
    the bias / projection params stay f32 for the f32 epilogue."""
    k1, k2, k3, k4 = jax.random.split(key, 4)

    # nn.Linear(in_features, HIDDEN * NUM_PIECES): weight (H*P, F), bias (H*P,)
    # torch output column o*P + p  <->  (maxout feature o, piece p)   [view(-1, H, P)]
    bound1 = 1.0 / jnp.sqrt(jnp.float32(in_features))
    w1_torch = jax.random.uniform(
        k1, (HIDDEN * NUM_PIECES, in_features), jnp.float32, -bound1, bound1)
    b1_torch = jax.random.uniform(
        k2, (HIDDEN * NUM_PIECES,), jnp.float32, -bound1, bound1)

    # Fused kernel layout (F, P*H), piece-major: column p*H + o = torch row o*P + p,
    # so every piece occupies a lane-aligned 128-wide column slab.
    w1 = jnp.transpose(
        w1_torch.reshape(HIDDEN, NUM_PIECES, in_features), (2, 1, 0)
    ).reshape(in_features, NUM_PIECES * HIDDEN).astype(jnp.bfloat16)
    b1 = jnp.transpose(
        b1_torch.reshape(HIDDEN, NUM_PIECES), (1, 0)
    ).reshape(1, NUM_PIECES * HIDDEN)

    # nn.Linear(HIDDEN, 1): weight (1, H) stored transposed as a (H, 1) column, bias (1, 1).
    bound2 = 1.0 / jnp.sqrt(jnp.float32(HIDDEN))
    w2t = jax.random.uniform(
        k3, (1, HIDDEN), jnp.float32, -bound2, bound2).reshape(HIDDEN, 1)
    b2 = jax.random.uniform(k4, (1,), jnp.float32, -bound2, bound2).reshape(1, 1)
    return w1, b1, w2t, b2


def reference(x, w1, b1, w2t, b2):
    """Pure-JAX reference with the same (fused, piece-major, bf16-matmul) numerics."""
    z = jnp.dot(x.astype(jnp.bfloat16), w1.astype(jnp.bfloat16),
                preferred_element_type=jnp.float32) + b1              # (B, P*H)
    h = jnp.max(z.reshape(-1, NUM_PIECES, HIDDEN), axis=1)            # (B, H) maxout
    logits = jnp.sum(h * w2t.astype(jnp.float32).T, axis=-1, keepdims=True) + b2
    return jax.nn.sigmoid(logits)


if __name__ == "__main__":
    B = 8
    IN_FEATURES = 32

    key = jax.random.PRNGKey(0)
    kx, kp = jax.random.split(key)
    x = jax.random.normal(kx, (B, IN_FEATURES), jnp.float32)
    w1, b1, w2t, b2 = init_params(kp, IN_FEATURES)

    out = jax.block_until_ready(original_discriminator(x, w1, b1, w2t, b2))
    ref = reference(x, w1, b1, w2t, b2)

    assert out.shape == (B, 1), out.shape
    assert jnp.allclose(out, ref, atol=2e-5, rtol=1e-4), (out, ref)

    print("KERNEL_OK")
</pallas_src>

<mosaic_0001>
module attributes {stable_mosaic.version = 11 : i64} {
  func.func @_disc_kernel(%arg0: i32, %arg1: i32, %arg2: memref<8x32xbf16, #tpu.memory_space<vmem>>, %arg3: memref<32x640xbf16, #tpu.memory_space<vmem>>, %arg4: memref<1x640xf32, #tpu.memory_space<vmem>>, %arg5: memref<128x1xf32, #tpu.memory_space<vmem>>, %arg6: memref<1x1xf32, #tpu.memory_space<smem>>, %arg7: memref<1x1x8xf32, #tpu.memory_space<vmem>>, %arg8: memref<8x640xf32, #tpu.memory_space<vmem>>) attributes {dimension_semantics = [#tpu.dimension_semantics<parallel>, #tpu.dimension_semantics<arbitrary>], iteration_bounds = array<i64: 1, 1>, scalar_prefetch = 0 : i64, scratch_operands = 1 : i64, tpu.core_type = #tpu.core_type<tc>, window_params = [{transform_indices = @transform_0, window_bounds = array<i64: 8, 32>}, {pipeline_mode = #tpu.pipeline_mode<synchronous>, transform_indices = @transform_1, window_bounds = array<i64: 32, 640>}, {pipeline_mode = #tpu.pipeline_mode<synchronous>, transform_indices = @transform_2, window_bounds = array<i64: 1, 640>}, {pipeline_mode = #tpu.pipeline_mode<synchronous>, transform_indices = @transform_3, window_bounds = array<i64: 128, 1>}, {transform_indices = @transform_4, window_bounds = array<i64: 1, 1>}, {transform_indices = @transform_5, window_bounds = array<i64: 1, 1, 8>}]} {
    %c0_i32 = arith.constant 0 : i32
    %0 = arith.cmpi eq, %arg1, %c0_i32 : i32
    %1 = arith.extui %0 : i1 to i32
    %c0_i32_0 = arith.constant 0 : i32
    %2 = arith.cmpi ne, %1, %c0_i32_0 : i32
    scf.if %2 {
      %cst_10 = arith.constant 0.000000e+00 : f32
      %12 = vector.broadcast %cst_10 : f32 to vector<8x640xf32>
      %c0_11 = arith.constant 0 : index
      %c0_12 = arith.constant 0 : index
      %13 = vector.load %arg8[%c0_11, %c0_12] : memref<8x640xf32, #tpu.memory_space<vmem>>, vector<8x640xf32>
      tpu.vector_store %arg8[%c0_11, %c0_12], %12 {strides = array<i32>} : memref<8x640xf32, #tpu.memory_space<vmem>>, vector<8x640xf32>,
    } else {
    }
    %c0 = arith.constant 0 : index
    %c0_1 = arith.constant 0 : index
    %3 = vector.load %arg8[%c0, %c0_1] : memref<8x640xf32, #tpu.memory_space<vmem>>, vector<8x640xf32>
    %c0_2 = arith.constant 0 : index
    %c0_3 = arith.constant 0 : index
    %4 = vector.load %arg2[%c0_2, %c0_3] : memref<8x32xbf16, #tpu.memory_space<vmem>>, vector<8x32xbf16>
    %c0_4 = arith.constant 0 : index
    %c0_5 = arith.constant 0 : index
    %5 = vector.load %arg3[%c0_4, %c0_5] : memref<32x640xbf16, #tpu.memory_space<vmem>>, vector<32x640xbf16>
    %cst = arith.constant dense<0.000000e+00> : vector<8x640xf32>
    %6 = tpu.matmul %4, %5, %cst {dimension_numbers = #tpu.dot_dimension_numbers<[1], [0], [0], [1], [0, 0, 1, 1], [], []>} : vector<8x32xbf16>, vector<32x640xbf16>, vector<8x640xf32> -> vector<8x640xf32>
    %7 = arith.addf %3, %6 : vector<8x640xf32>
    %c0_6 = arith.constant 0 : index
    %c0_7 = arith.constant 0 : index
    %8 = vector.load %arg8[%c0_6, %c0_7] : memref<8x640xf32, #tpu.memory_space<vmem>>, vector<8x640xf32>
    tpu.vector_store %arg8[%c0_6, %c0_7], %7 {strides = array<i32>} : memref<8x640xf32, #tpu.memory_space<vmem>>, vector<8x640xf32>,
    %c0_i32_8 = arith.constant 0 : i32
    %9 = arith.cmpi eq, %arg1, %c0_i32_8 : i32
    %10 = arith.extui %9 : i1 to i32
    %c0_i32_9 = arith.constant 0 : i32
    %11 = arith.cmpi ne, %10, %c0_i32_9 : i32
    scf.if %11 {
      %c0_10 = arith.constant 0 : index
      %c0_11 = arith.constant 0 : index
      %12 = vector.load %arg8[%c0_10, %c0_11] : memref<8x640xf32, #tpu.memory_space<vmem>>, vector<8x640xf32>
      %c0_12 = arith.constant 0 : index
      %c0_13 = arith.constant 0 : index
      %13 = vector.load %arg4[%c0_12, %c0_13] : memref<1x640xf32, #tpu.memory_space<vmem>>, vector<1x640xf32>
      %14 = vector.broadcast %13 : vector<1x640xf32> to vector<8x640xf32>
      %15 = arith.addf %12, %14 : vector<8x640xf32>
      %16 = vector.extract_strided_slice %15 {offsets = [0, 0], sizes = [8, 128], strides = [1, 1]} : vector<8x640xf32> to vector<8x128xf32>
      %17 = vector.extract_strided_slice %15 {offsets = [0, 128], sizes = [8, 128], strides = [1, 1]} : vector<8x640xf32> to vector<8x128xf32>
      %18 = arith.maximumf %16, %17 : vector<8x128xf32>
      %19 = vector.extract_strided_slice %15 {offsets = [0, 256], sizes = [8, 128], strides = [1, 1]} : vector<8x640xf32> to vector<8x128xf32>
      %20 = arith.maximumf %18, %19 : vector<8x128xf32>
      %21 = vector.extract_strided_slice %15 {offsets = [0, 384], sizes = [8, 128], strides = [1, 1]} : vector<8x640xf32> to vector<8x128xf32>
      %22 = arith.maximumf %20, %21 : vector<8x128xf32>
      %23 = vector.extract_strided_slice %15 {offsets = [0, 512], sizes = [8, 128], strides = [1, 1]} : vector<8x640xf32> to vector<8x128xf32>
      %24 = arith.maximumf %22, %23 : vector<8x128xf32>
      %25 = tpu.transpose %24, [1, 0] : vector<8x128xf32> -> vector<128x8xf32>
      %c0_14 = arith.constant 0 : index
      %c0_15 = arith.constant 0 : index
      %26 = vector.load %arg5[%c0_14, %c0_15] : memref<128x1xf32, #tpu.memory_space<vmem>>, vector<128x1xf32>
      %27 = vector.broadcast %26 : vector<128x1xf32> to vector<128x8xf32>
      %28 = arith.mulf %25, %27 : vector<128x8xf32>
      %cst_16 = arith.constant dense<0.000000e+00> : vector<8xf32>
      %29 = vector.multi_reduction <add>, %28, %cst_16 [0] : vector<128x8xf32> to vector<8xf32>
      %30 = vector.shape_cast %29 : vector<8xf32> to vector<1x8xf32>
      %c0_17 = arith.constant 0 : index
      %c0_18 = arith.constant 0 : index
      %31 = memref.load %arg6[%c0_17, %c0_18] : memref<1x1xf32, #tpu.memory_space<smem>>
      %32 = vector.broadcast %31 : f32 to vector<1x8xf32>
      %33 = arith.addf %30, %32 : vector<1x8xf32>
      %34 = arith.negf %33 : vector<1x8xf32>
      %35 = math.exp %34 : vector<1x8xf32>
      %cst_19 = arith.constant 1.000000e+00 : f32
      %36 = vector.broadcast %cst_19 : f32 to vector<1x8xf32>
      %37 = arith.addf %36, %35 : vector<1x8xf32>
      %38 = arith.divf %36, %37 : vector<1x8xf32>
      %39 = vector.shape_cast %38 : vector<1x8xf32> to vector<1x1x8xf32>
      %c0_20 = arith.constant 0 : index
      %c0_21 = arith.constant 0 : index
      %c0_22 = arith.constant 0 : index
      %40 = vector.load %arg7[%c0_20, %c0_21, %c0_22] : memref<1x1x8xf32, #tpu.memory_space<vmem>>, vector<1x1x8xf32>
      tpu.vector_store %arg7[%c0_20, %c0_21, %c0_22], %39 {strides = array<i32>} : memref<1x1x8xf32, #tpu.memory_space<vmem>>, vector<1x1x8xf32>,
    } else {
    }
    return
  }
  func.func @transform_0(%arg0: i32, %arg1: i32) -> (i32, i32) {
    %c0_i32 = arith.constant 0 : i32
    return %arg0, %arg1 : i32, i32
  }
  func.func @transform_1(%arg0: i32, %arg1: i32) -> (i32, i32) {
    %c0_i32 = arith.constant 0 : i32
    %c0_i32_0 = arith.constant 0 : i32
    return %arg1, %c0_i32 : i32, i32
  }
  func.func @transform_2(%arg0: i32, %arg1: i32) -> (i32, i32) {
    %c0_i32 = arith.constant 0 : i32
    %c0_i32_0 = arith.constant 0 : i32
    %c0_i32_1 = arith.constant 0 : i32
    return %c0_i32, %c0_i32_0 : i32, i32
  }
  func.func @transform_3(%arg0: i32, %arg1: i32) -> (i32, i32) {
    %c0_i32 = arith.constant 0 : i32
    %c0_i32_0 = arith.constant 0 : i32
    %c0_i32_1 = arith.constant 0 : i32
    return %c0_i32, %c0_i32_0 : i32, i32
  }
  func.func @transform_4(%arg0: i32, %arg1: i32) -> (i32, i32) {
    %c0_i32 = arith.constant 0 : i32
    %c0_i32_0 = arith.constant 0 : i32
    %c0_i32_1 = arith.constant 0 : i32
    return %c0_i32, %c0_i32_0 : i32, i32
  }
  func.func @transform_5(%arg0: i32, %arg1: i32) -> (i32, i32, i32) {
    %c0_i32 = arith.constant 0 : i32
    %c0_i32_0 = arith.constant 0 : i32
    %c0_i32_1 = arith.constant 0 : i32
    return %arg0, %c0_i32, %c0_i32_0 : i32, i32, i32
  }
}

</mosaic_0001>

<llo_original>
// kernel: original_discriminator.1
$region0: #{original_discriminator.1}
  #allocation0 [shape = 'u32[]', space=smem, size = 0x4, offset = 0x4, fixed_abs, tag = 'smem constant byte address 0x4 - core index']
  #allocation1 [shape = 'u32[144,128]{1,0:T(1,128)}', space=vmem, size = 0x12000, scoped, tag = 'internal scratch']
  #allocation2 [shape = 'f32[8,640]{1,0:T(8,128)}', space=vmem, size = 0x5000, scoped, tag = 'scratch operand']
  #allocation3 [shape = 'f32[1,1]{1,0:T(1,128)S(6)}', space=smem, size = 0x200, scoped, tag = 'scoped memory for original_discriminator.1']
  %s0 = inlined_call_operand.vmem [shape: bf16[8,32], index: 0, kind: input, shape index: {}]
  %s1 = inlined_call_operand.vmem [shape: bf16[32,640], index: 1, kind: input, shape index: {}]
  %s2 = inlined_call_operand.vmem [shape: f32[1,640], index: 2, kind: input, shape index: {}]
  %s3 = inlined_call_operand.vmem [shape: f32[128,1], index: 3, kind: input, shape index: {}]
  %s4 = inlined_call_operand.<no memory space> [shape: f32[1,1], index: 4, kind: input, shape index: {}]
  %s5 = inlined_call_operand.hbm [shape: f32[1,1,8], index: 5, kind: output, shape index: {}]
  %s6 = sld [smem:[#allocation0]]
  $region38: #{original_discriminator.1} parent=0
    _
  %s8 = ssub.s32 1, %s6
  %s9 = scalar_select 0, %s8, %s6
  %10 = sst [smem:[#allocation3]] %s4
  $region1: #{original_discriminator.1} parent=0
    #allocation4 [shape = 'u8[512]{0}', space=vmem, size = 0x400, scoped, tag = 'output window, operand 0, single buffered']
    #allocation5 [shape = 's32[1]{0}', space=sflag, size = 0x4, scoped, tag = 'scoped memory for original_discriminator.1']
    %11 = vsyncpa [#allocation5], 0
    // Predicated region
    $region2: #{original_discriminator.1} parent=1 // pred_check
      _
    $region3: #{original_discriminator.1} parent=1 // pred_check_branch
      %13 = sbr.rel (0) target = $region5
    $region4: #{original_discriminator.1} parent=1 // pred_region
      _
    $region5: #{original_discriminator.1} parent=1 // pred_fallthru
      _
    // Predicated region
    $region6: #{original_discriminator.1} parent=1 // pred_check
      _
    $region7: #{original_discriminator.1} parent=1 // pred_check_branch
      %15 = sbr.rel (0) target = $region9
    $region8: #{original_discriminator.1} parent=1 // pred_region
      _
    $region9: #{original_discriminator.1} parent=1 // pred_fallthru
      _
    // Predicated region
    $region10: #{original_discriminator.1} parent=1 // pred_check
      _
    $region11: #{original_discriminator.1} parent=1 // pred_check_branch
      %17 = sbr.rel (0) target = $region13
    $region12: #{original_discriminator.1} parent=1 // pred_region
      _
    $region13: #{original_discriminator.1} parent=1 // pred_fallthru
      _
    // Predicated region
    $region14: #{original_discriminator.1} parent=1 // pred_check
      _
    $region15: #{original_discriminator.1} parent=1 // pred_check_branch
      %19 = sbr.rel (0) target = $region17
    $region16: #{original_discriminator.1} parent=1 // pred_region
      _
    $region17: #{original_discriminator.1} parent=1 // pred_fallthru
      _
    // Predicated region
    $region18: #{original_discriminator.1} parent=1 // pred_check
      _
    $region19: #{original_discriminator.1} parent=1 // pred_check_branch
      %21 = sbr.rel (0) target = $region21
    $region20: #{original_discriminator.1} parent=1 // pred_region
      _
    $region21: #{original_discriminator.1} parent=1 // pred_fallthru
      _
    %p23 = scmp.eq.s32.totalorder 0, 0
    // Predicated region
    $region22: #{original_discriminator.1} parent=1 // pred_check
      %p24 = pneg %p23
    $region23: #{original_discriminator.1} parent=1 // pred_check_branch
      %26 = sbr.rel (%p24) target = $region25
    $region24: #{original_discriminator.1} parent=1 // pred_region
      %27 = vst [vmem:[#allocation2] sm:$0xff] 0.0
      %28 = vst [vmem:[#allocation2 + $0x8] sm:$0xff] 0.0
      %29 = vst [vmem:[#allocation2 + $0x10] sm:$0xff] 0.0
      %30 = vst [vmem:[#allocation2 + $0x18] sm:$0xff] 0.0
      %31 = vst [vmem:[#allocation2 + $0x20] sm:$0xff] 0.0
    $region25: #{original_discriminator.1} parent=1 // pred_fallthru
      _
    %v32 = vld [vmem:[#allocation2] sm:$0xff]
    %v33 = vld [vmem:[#allocation2 + $0x8] sm:$0xff]
    %v34 = vld [vmem:[#allocation2 + $0x10] sm:$0xff]
    %v35 = vld [vmem:[#allocation2 + $0x18] sm:$0xff]
    %v36 = vld [vmem:[#allocation2 + $0x20] sm:$0xff]
    %v37 = vld [vmem:[%s0] sm:$0xf]
    %v38 = vld [vmem:[%s1] sm:$0xff]
    %v39 = vld [vmem:[%s1 + $0x8] sm:$0xff]
    %v40 = vld [vmem:[%s1 + $0x10] sm:$0xf]
    %v41 = vld [vmem:[%s1 + $0x14] sm:$0xff]
    %v42 = vld [vmem:[%s1 + $0x1c] sm:$0xff]
    %v43 = vld [vmem:[%s1 + $0x24] sm:$0xf]
    %v44 = vld [vmem:[%s1 + $0x28] sm:$0xff]
    %v45 = vld [vmem:[%s1 + $0x30] sm:$0xff]
    %v46 = vld [vmem:[%s1 + $0x38] sm:$0xf]
    %v47 = vld [vmem:[%s1 + $0x3c] sm:$0xff]
    %v48 = vld [vmem:[%s1 + $0x44] sm:$0xff]
    %v49 = vld [vmem:[%s1 + $0x4c] sm:$0xf]
    %v62 = vunpack.c.l.b16 %v38
    %v63 = vunpack.c.h.b16 %v38
    %v64 = vunpack.c.l.b16 %v39
    %v65 = vunpack.c.h.b16 %v39
    %v66 = vunpack.c.l.b16 %v40
    %v67 = vunpack.c.l.b16 %v41
    %v68 = vunpack.c.h.b16 %v41
    %v69 = vunpack.c.l.b16 %v42
    %v70 = vunpack.c.h.b16 %v42
    %v71 = vunpack.c.l.b16 %v43
    %v72 = vunpack.c.l.b16 %v44
    %v73 = vunpack.c.h.b16 %v44
    %v74 = vunpack.c.l.b16 %v45
    %v75 = vunpack.c.h.b16 %v45
    %v76 = vunpack.c.l.b16 %v46
    %v77 = vunpack.c.l.b16 %v47
    %v78 = vunpack.c.h.b16 %v47
    %v79 = vunpack.c.l.b16 %v48
    %v80 = vunpack.c.h.b16 %v48
    %v81 = vunpack.c.l.b16 %v49
    %v82 = vpack.c.b16 %v67, %v62
    %v83 = vpack.c.b16 %v68, %v63
    %v84 = vpack.c.b16 %v69, %v64
    %v85 = vpack.c.b16 %v70, %v65
    %v86 = vpack.c.b16 %v71, %v66
    %v87 = vpack.c.b16 %v77, %v72
    %v88 = vpack.c.b16 %v78, %v73
    %v89 = vpack.c.b16 %v79, %v74
    %v90 = vpack.c.b16 %v80, %v75
    %v91 = vpack.c.b16 %v81, %v76
    %vm102 = vcmask 261120
    %v104 = vsel %vm102, %v37, 0
    %106 = vmatprep.subr.bf16.mxu0 0
    %107 = vmatpush1.bf16.msra.mxu0 0
    %108 = vmatprep.subr.bf16.mxu0 0
    %109 = vmatpush1.bf16.msra.mxu0 0
    %110 = vmatprep.subr.bf16.mxu0 0
    %111 = vmatpush1.bf16.msra.mxu0 0
    %112 = vmatprep.subr.bf16.mxu0 0
    %113 = vmatpush1.bf16.msra.mxu0 0
    %114 = vmatprep.subr.bf16.mxu0 0
    %115 = vmatpush1.bf16.msra.mxu0 0
    %116 = vmatprep.subr.bf16.mxu0 0
    %117 = vmatpush1.bf16.msra.mxu0 0
    %118 = vmatprep.subr.bf16.mxu0 %v88
    %119 = vmatpush1.bf16.msra.mxu0 %v87
    %120 = vmatprep.subr.bf16.mxu0 %v83
    %121 = vmatpush1.bf16.msra.mxu0 %v82
    %122 = vmatprep.subr.bf16.mxu0 0
    %123 = vmatpush2.bf16.msra.mxu0 0
    %124 = vmatprep.subr.bf16.mxu0 0
    %125 = vmatpush2.bf16.msra.mxu0 0
    %126 = vmatprep.subr.bf16.mxu0 0
    %127 = vmatpush2.bf16.msra.mxu0 0
    %128 = vmatprep.subr.bf16.mxu0 0
    %129 = vmatpush2.bf16.msra.mxu0 0
    %130 = vmatprep.subr.bf16.mxu0 0
    %131 = vmatpush2.bf16.msra.mxu0 0
    %132 = vmatprep.subr.bf16.mxu0 0
    %133 = vmatpush2.bf16.msra.mxu0 0
    %134 = vmatprep.subr.bf16.mxu0 0
    %135 = vmatpush2.bf16.msra.mxu0 0
    %136 = vmatprep.subr.bf16.mxu0 0
    %137 = vmatpush2.bf16.msra.mxu0 0
    %138 = vmatprep.mubr.bf16.mxu0 0
    %139 = vmatmul.mubr.bf16.gmra.mxu0 %v104
    %v140 = vpop.f32.mrf.mxu0
    %v141 = vadd.f32 0.0, %v140
    %v142 = vpop.f32.mrf.mxu0
    %v143 = vadd.f32 0.0, %v142
    %v144 = vpop.f32.mrf.mxu0
    %v145 = vpop.f32.mrf.mxu0
    %146 = vdwg.mxu0
    %147 = vmatprep.subr.bf16.mxu0 0
    %148 = vmatpush1.bf16.msra.mxu0 0
    %149 = vmatprep.subr.bf16.mxu0 0
    %150 = vmatpush1.bf16.msra.mxu0 0
    %151 = vmatprep.subr.bf16.mxu0 0
    %152 = vmatpush1.bf16.msra.mxu0 0
    %153 = vmatprep.subr.bf16.mxu0 0
    %154 = vmatpush1.bf16.msra.mxu0 0
    %155 = vmatprep.subr.bf16.mxu0 0
    %156 = vmatpush1.bf16.msra.mxu0 0
    %157 = vmatprep.subr.bf16.mxu0 0
    %158 = vmatpush1.bf16.msra.mxu0 0
    %159 = vmatprep.subr.bf16.mxu0 %v90
    %160 = vmatpush1.bf16.msra.mxu0 %v89
    %161 = vmatprep.subr.bf16.mxu0 %v85
    %162 = vmatpush1.bf16.msra.mxu0 %v84
    %163 = vmatprep.subr.bf16.mxu0 0
    %164 = vmatpush2.bf16.msra.mxu0 0
    %165 = vmatprep.subr.bf16.mxu0 0
    %166 = vmatpush2.bf16.msra.mxu0 0
    %167 = vmatprep.subr.bf16.mxu0 0
    %168 = vmatpush2.bf16.msra.mxu0 0
    %169 = vmatprep.subr.bf16.mxu0 0
    %170 = vmatpush2.bf16.msra.mxu0 0
    %171 = vmatprep.subr.bf16.mxu0 0
    %172 = vmatpush2.bf16.msra.mxu0 0
    %173 = vmatprep.subr.bf16.mxu0 0
    %174 = vmatpush2.bf16.msra.mxu0 0
    %175 = vmatprep.subr.bf16.mxu0 0
    %176 = vmatpush2.bf16.msra.mxu0 0
    %177 = vmatprep.subr.bf16.mxu0 0
    %178 = vmatpush2.bf16.msra.mxu0 0
    %179 = vmatprep.mubr.bf16.mxu0 0
    %180 = vmatmul.mubr.bf16.gmra.mxu0 %v104
    %v181 = vpop.f32.mrf.mxu0
    %v182 = vadd.f32 0.0, %v181
    %v183 = vpop.f32.mrf.mxu0
    %v184 = vadd.f32 0.0, %v183
    %v185 = vpop.f32.mrf.mxu0
    %v186 = vpop.f32.mrf.mxu0
    %187 = vdwg.mxu0
    %188 = vmatprep.subr.bf16.mxu0 0
    %189 = vmatpush1.bf16.msra.mxu0 0
    %190 = vmatprep.subr.bf16.mxu0 0
    %191 = vmatpush1.bf16.msra.mxu0 0
    %192 = vmatprep.subr.bf16.mxu0 0
    %193 = vmatpush1.bf16.msra.mxu0 0
    %194 = vmatprep.subr.bf16.mxu0 0
    %195 = vmatpush1.bf16.msra.mxu0 0
    %196 = vmatprep.subr.bf16.mxu0 0
    %197 = vmatpush1.bf16.msra.mxu0 0
    %198 = vmatprep.subr.bf16.mxu0 0
    %199 = vmatpush1.bf16.msra.mxu0 0
    %200 = vmatprep.subr.bf16.mxu0 0
    %201 = vmatpush1.bf16.msra.mxu0 %v91
    %202 = vmatprep.subr.bf16.mxu0 0
    %203 = vmatpush1.bf16.msra.mxu0 %v86
    %204 = vmatprep.subr.bf16.mxu0 0
    %205 = vmatpush2.bf16.msra.mxu0 0
    %206 = vmatprep.subr.bf16.mxu0 0
    %207 = vmatpush2.bf16.msra.mxu0 0
    %208 = vmatprep.subr.bf16.mxu0 0
    %209 = vmatpush2.bf16.msra.mxu0 0
    %210 = vmatprep.subr.bf16.mxu0 0
    %211 = vmatpush2.bf16.msra.mxu0 0
    %212 = vmatprep.subr.bf16.mxu0 0
    %213 = vmatpush2.bf16.msra.mxu0 0
    %214 = vmatprep.subr.bf16.mxu0 0
    %215 = vmatpush2.bf16.msra.mxu0 0
    %216 = vmatprep.subr.bf16.mxu0 0
    %217 = vmatpush2.bf16.msra.mxu0 0
    %218 = vmatprep.subr.bf16.mxu0 0
    %219 = vmatpush2.bf16.msra.mxu0 0
    %220 = vmatprep.mubr.bf16.mxu0 0
    %221 = vmatmul.mubr.bf16.gmra.mxu0 %v104
    %v222 = vpop.f32.mrf.mxu0
    %v223 = vadd.f32 0.0, %v222
    %v224 = vpop.f32.mrf.mxu0
    %v225 = vpop.f32.mrf.mxu0
    %v226 = vpop.f32.mrf.mxu0
    %227 = vdwg.mxu0
    %v228 = vadd.f32 %v32, %v141
    %v229 = vadd.f32 %v33, %v143
    %v230 = vadd.f32 %v34, %v182
    %v231 = vadd.f32 %v35, %v184
    %v232 = vadd.f32 %v36, %v223
    %233 = vst [vmem:[#allocation2] sm:$0xff] %v228
    %234 = vst [vmem:[#allocation2 + $0x8] sm:$0xff] %v229
    %235 = vst [vmem:[#allocation2 + $0x10] sm:$0xff] %v230
    %236 = vst [vmem:[#allocation2 + $0x18] sm:$0xff] %v231
    %237 = vst [vmem:[#allocation2 + $0x20] sm:$0xff] %v232
    // Predicated region
    $region26: #{original_discriminator.1} parent=1 // pred_check
      %p238 = pneg %p23
    $region27: #{original_discriminator.1} parent=1 // pred_check_branch
      %240 = sbr.rel (%p238) target = $region29
    $region28: #{original_discriminator.1} parent=1 // pred_region
      %v241 = vld [vmem:[#allocation2] sm:$0xff]
      %v242 = vld [vmem:[#allocation2 + $0x8] sm:$0xff]
      %v243 = vld [vmem:[#allocation2 + $0x10] sm:$0xff]
      %v244 = vld [vmem:[#allocation2 + $0x18] sm:$0xff]
      %v245 = vld [vmem:[#allocation2 + $0x20] sm:$0xff]
      %v246 = vld [vmem:[%s2] sm:$0x1f]
      %v248 = vlaneseq
      %v249 = vshrl.u32 %v248, 7
      %v250 = vsub.s32 0, %v249
      %v251 = vrot.slane %v246, %v250
      %v252 = vlaneseq
      %v253 = vshrl.u32 %v252, 7
      %v254 = vsub.s32 1, %v253
      %v255 = vrot.slane %v246, %v254
      %v256 = vlaneseq
      %v257 = vshrl.u32 %v256, 7
      %v258 = vsub.s32 2, %v257
      %v259 = vrot.slane %v246, %v258
      %v260 = vlaneseq
      %v261 = vshrl.u32 %v260, 7
      %v262 = vsub.s32 3, %v261
      %v263 = vrot.slane %v246, %v262
      %v264 = vlaneseq
      %v265 = vshrl.u32 %v264, 7
      %v266 = vsub.s32 4, %v265
      %v267 = vrot.slane %v246, %v266
      %v273 = vadd.f32 %v241, %v251
      %v274 = vadd.f32 %v242, %v255
      %v275 = vadd.f32 %v243, %v259
      %v276 = vadd.f32 %v244, %v263
      %v277 = vadd.f32 %v245, %v267
      %v278 = vmax.f32 %v273, %v274
      %v279 = vmax.f32 %v278, %v275
      %v280 = vmax.f32 %v279, %v276
      %v281 = vmax.f32 %v280, %v277
      %282 = vxpose.xlu0.b32.start [1/16] %v281, 128
      %283 = vxpose.xlu0.b32.cont [2/16] 0.0, 128
      %284 = vxpose.xlu0.b32.cont [3/16] 0.0, 128
      %285 = vxpose.xlu0.b32.cont [4/16] 0.0, 128
      %286 = vxpose.xlu0.b32.cont [5/16] 0.0, 128
      %287 = vxpose.xlu0.b32.cont [6/16] 0.0, 128
      %288 = vxpose.xlu0.b32.cont [7/16] 0.0, 128
      %289 = vxpose.xlu0.b32.cont [8/16] 0.0, 128
      %290 = vxpose.xlu0.b32.cont [9/16] 0.0, 128
      %291 = vxpose.xlu0.b32.cont [10/16] 0.0, 128
      %292 = vxpose.xlu0.b32.cont [11/16] 0.0, 128
      %293 = vxpose.xlu0.b32.cont [12/16] 0.0, 128
      %294 = vxpose.xlu0.b32.cont [13/16] 0.0, 128
      %295 = vxpose.xlu0.b32.cont [14/16] 0.0, 128
      %296 = vxpose.xlu0.b32.cont [15/16] 0.0, 128
      %297 = vxpose.xlu0.b32.end [16/16] 0.0, 128
      %v298 = vpop.trf.xlu0
      %v299 = vpop.trf.xlu0
      %v300 = vpop.trf.xlu0
      %v301 = vpop.trf.xlu0
      %v302 = vpop.trf.xlu0
      %v303 = vpop.trf.xlu0
      %v304 = vpop.trf.xlu0
      %v305 = vpop.trf.xlu0
      %v306 = vpop.trf.xlu0
      %v307 = vpop.trf.xlu0
      %v308 = vpop.trf.xlu0
      %v309 = vpop.trf.xlu0
      %v310 = vpop.trf.xlu0
      %v311 = vpop.trf.xlu0
      %v312 = vpop.trf.xlu0
      %v313 = vpop.trf.xlu0
      %v314 = vld [vmem:[%s3] sm:$0xff]
      %v315 = vld [vmem:[%s3 + $0x8] sm:$0xff]
      %v316 = vld [vmem:[%s3 + $0x10] sm:$0xff]
      %v317 = vld [vmem:[%s3 + $0x18] sm:$0xff]
      %v318 = vld [vmem:[%s3 + $0x20] sm:$0xff]
      %v319 = vld [vmem:[%s3 + $0x28] sm:$0xff]
      %v320 = vld [vmem:[%s3 + $0x30] sm:$0xff]
      %v321 = vld [vmem:[%s3 + $0x38] sm:$0xff]
      %v322 = vld [vmem:[%s3 + $0x40] sm:$0xff]
      %v323 = vld [vmem:[%s3 + $0x48] sm:$0xff]
      %v324 = vld [vmem:[%s3 + $0x50] sm:$0xff]
      %v325 = vld [vmem:[%s3 + $0x58] sm:$0xff]
      %v326 = vld [vmem:[%s3 + $0x60] sm:$0xff]
      %v327 = vld [vmem:[%s3 + $0x68] sm:$0xff]
      %v328 = vld [vmem:[%s3 + $0x70] sm:$0xff]
      %v329 = vld [vmem:[%s3 + $0x78] sm:$0xff]
      %331 = vset.pattern.permute.xlu0 0
      %332 = vperm.xlu0 %331, %v314
      %v333 = vpop.permute.xlu0 %332
      %336 = vset.pattern.permute.xlu0 0
      %337 = vperm.xlu0 %336, %v315
      %v338 = vpop.permute.xlu0 %337
      %341 = vset.pattern.permute.xlu0 0
      %342 = vperm.xlu0 %341, %v316
      %v343 = vpop.permute.xlu0 %342
      %346 = vset.pattern.permute.xlu0 0
      %347 = vperm.xlu0 %346, %v317
      %v348 = vpop.permute.xlu0 %347
      %351 = vset.pattern.permute.xlu0 0
      %352 = vperm.xlu0 %351, %v318
      %v353 = vpop.permute.xlu0 %352
      %356 = vset.pattern.permute.xlu0 0
      %357 = vperm.xlu0 %356, %v319
      %v358 = vpop.permute.xlu0 %357
      %361 = vset.pattern.permute.xlu0 0
      %362 = vperm.xlu0 %361, %v320
      %v363 = vpop.permute.xlu0 %362
      %366 = vset.pattern.permute.xlu0 0
      %367 = vperm.xlu0 %366, %v321
      %v368 = vpop.permute.xlu0 %367
      %371 = vset.pattern.permute.xlu0 0
      %372 = vperm.xlu0 %371, %v322
      %v373 = vpop.permute.xlu0 %372
      %376 = vset.pattern.permute.xlu0 0
      %377 = vperm.xlu0 %376, %v323
      %v378 = vpop.permute.xlu0 %377
      %381 = vset.pattern.permute.xlu0 0
      %382 = vperm.xlu0 %381, %v324
      %v383 = vpop.permute.xlu0 %382
      %386 = vset.pattern.permute.xlu0 0
      %387 = vperm.xlu0 %386, %v325
      %v388 = vpop.permute.xlu0 %387
      %391 = vset.pattern.permute.xlu0 0
      %392 = vperm.xlu0 %391, %v326
      %v393 = vpop.permute.xlu0 %392
      %396 = vset.pattern.permute.xlu0 0
      %397 = vperm.xlu0 %396, %v327
      %v398 = vpop.permute.xlu0 %397
      %401 = vset.pattern.permute.xlu0 0
      %402 = vperm.xlu0 %401, %v328
      %v403 = vpop.permute.xlu0 %402
      %406 = vset.pattern.permute.xlu0 0
      %407 = vperm.xlu0 %406, %v329
      %v408 = vpop.permute.xlu0 %407
      %v410 = vmul.f32 %v298, %v333
      %v411 = vmul.f32 %v299, %v338
      %v412 = vmul.f32 %v300, %v343
      %v413 = vmul.f32 %v301, %v348
      %v414 = vmul.f32 %v302, %v353
      %v415 = vmul.f32 %v303, %v358
      %v416 = vmul.f32 %v304, %v363
      %v417 = vmul.f32 %v305, %v368
      %v418 = vmul.f32 %v306, %v373
      %v419 = vmul.f32 %v307, %v378
      %v420 = vmul.f32 %v308, %v383
      %v421 = vmul.f32 %v309, %v388
      %v422 = vmul.f32 %v310, %v393
      %v423 = vmul.f32 %v311, %v398
      %v424 = vmul.f32 %v312, %v403
      %v425 = vmul.f32 %v313, %v408
      %vm426 = vcmask 64512
      %v427 = vsel %vm426, %v410, 0.0
      %v428 = vsel %vm426, %v411, 0.0
      %v429 = vadd.f32 %v427, %v428
      %v430 = vsel %vm426, %v412, 0.0
      %v431 = vadd.f32 %v429, %v430
      %v432 = vsel %vm426, %v413, 0.0
      %v433 = vadd.f32 %v431, %v432
      %v434 = vsel %vm426, %v414, 0.0
      %v435 = vadd.f32 %v433, %v434
      %v436 = vsel %vm426, %v415, 0.0
      %v437 = vadd.f32 %v435, %v436
      %v438 = vsel %vm426, %v416, 0.0
      %v439 = vadd.f32 %v437, %v438
      %v440 = vsel %vm426, %v417, 0.0
      %v441 = vadd.f32 %v439, %v440
      %v442 = vsel %vm426, %v418, 0.0
      %v443 = vadd.f32 %v441, %v442
      %v444 = vsel %vm426, %v419, 0.0
      %v445 = vadd.f32 %v443, %v444
      %v446 = vsel %vm426, %v420, 0.0
      %v447 = vadd.f32 %v445, %v446
      %v448 = vsel %vm426, %v421, 0.0
      %v449 = vadd.f32 %v447, %v448
      %v450 = vsel %vm426, %v422, 0.0
      %v451 = vadd.f32 %v449, %v450
      %v452 = vsel %vm426, %v423, 0.0
      %v453 = vadd.f32 %v451, %v452
      %v454 = vsel %vm426, %v424, 0.0
      %v455 = vadd.f32 %v453, %v454
      %v456 = vsel %vm426, %v425, 0.0
      %v457 = vadd.f32 %v455, %v456
      %v458 = vrot.slane %v457, 4
      %v459 = vadd.f32 %v457, %v458
      %v460 = vrot.slane %v459, 2
      %v461 = vadd.f32 %v459, %v460
      %v462 = vrot.slane %v461, 1
      %v463 = vadd.f32 %v461, %v462
      %s464 = sld [smem:[#allocation3]]
      %v465 = vstv %s464
      %v466 = vadd.f32 %v463, %v465
      %v467 = vxor.u32 %v466, 2147483648
      %v468 = vmul.f32 %v467, 1.442695
      %v469 = vpow.pop %v468
      %v470 = vadd.f32 %v469, 1.0
      %v471 = vrcp.pop %v470
      %v472 = vmul.f32 1.0, %v471
      %vm473 = vcmask 57344
      %474 = vst.msk [vmem:[#allocation4] sm:$0x1] %vm473, %v472
    $region29: #{original_discriminator.1} parent=1 // pred_fallthru
      _
    // Predicated region
    $region30: #{original_discriminator.1} parent=1 // pred_check
      _
    $region31: #{original_discriminator.1} parent=1 // pred_check_branch
      %476 = sbr.rel (0) target = $region33
    $region32: #{original_discriminator.1} parent=1 // pred_region
      %s478 = ssub.s32 16, 16
      %479 = vsyncadd [#allocation5], %s478
      %s481 = sshll.u32 [#allocation4], 4
      %s482 = int_to_ptr.vmem [resolvable:$true] %s481
      %484 = dma.vmem_to_hbm [thread:$0]  %s482, 16, %s5, [#allocation5]
    $region33: #{original_discriminator.1} parent=1 // pred_fallthru
      _
    // Predicated region
    $region34: #{original_discriminator.1} parent=1 // pred_check
      _
    $region35: #{original_discriminator.1} parent=1 // pred_check_branch
      %486 = sbr.rel (0) target = $region37
    $region36: #{original_discriminator.1} parent=1 // pred_region
      %487 = dma.done [#allocation5], 16
    $region37: #{original_discriminator.1} parent=1 // pred_fallthru
      _
    %488 = vsyncpa [#allocation5], 1

</llo_original>
